<compile_context>
chip_gen: v7x
topology: tpu7x:2x2x1
jax: 0.10.0
libtpu: 0.0.40
codegen_flags: <defaults>
</compile_context>

<pallas_src>
import functools

import jax
import jax.numpy as jnp
from jax.experimental import pallas as pl
from jax.experimental.pallas import tpu as pltpu


F_PAD = 128  # lane-dense feature width (pad emb/hidden/output dims to 128)


# ----------------------------- Pallas kernel --------------------------------
def _gcn_fused_kernel(a_ref, h0_ref, w_ref, b_ref, o_ref, h_scr, *, relu_flags):
    """Fused multi-layer GraphConv: h <- act_l(A_norm @ (h @ W_l) + b_l).

    a_ref  : [Np, Np]       bf16   normalized adjacency
    h0_ref : [Np, F_PAD]    bf16   embedded node features (lane-padded)
    w_ref  : [L, F_PAD, F_PAD] bf16 stacked (padded) layer weights
    b_ref  : [L, 1, F_PAD]  f32    stacked (padded) biases
    o_ref  : [Np, F_PAD]    f32    output (last layer, lane-padded)
    h_scr  : [Np, F_PAD]    f32    VMEM-resident intermediate h
    """
    num_layers = len(relu_flags)
    a_bf = a_ref[...]                      # bf16 MXU operand, loaded once
    h_bf = h0_ref[...]                     # layer-0 input, already bf16
    for li in range(num_layers):           # static unroll over layers
        # Feature transform: H @ W  (MXU, bf16 in / f32 accumulate).
        xw = jnp.dot(h_bf, w_ref[li], preferred_element_type=jnp.float32)
        # Neighborhood aggregation: A_norm @ (H @ W)  (MXU).
        agg = jnp.dot(a_bf, xw.astype(jnp.bfloat16),
                      preferred_element_type=jnp.float32)
        out = agg + b_ref[li]              # f32 bias add (epilogue)
        if relu_flags[li]:
            out = jnp.maximum(out, 0.0)    # f32 ReLU fused into the same pass
        if li < num_layers - 1:
            h_scr[...] = out               # h stays resident in VMEM
            h_bf = h_scr[...].astype(jnp.bfloat16)
        else:
            o_ref[...] = out.astype(o_ref.dtype)


def _round_up(x, m):
    return ((x + m - 1) // m) * m


# ------------------------------ GCN forward ----------------------------------
def gcn_forward(a_norm, dep_labels, params):
    """Full GCN forward: embedding gather (JAX) + one fused Pallas kernel."""
    layers = params["layers"]
    num_layers = len(layers)
    n = dep_labels.shape[0]
    n_pad = _round_up(max(n, 8), 8)
    f_out_last = layers[-1][0].shape[1]

    # Embedding lookup (glue, plain JAX gather).
    h0 = params["embedding"][dep_labels]                     # [n, dep_emb_size]
    # TODO(synk): nn.Dropout between layers is identity at inference; omitted.

    # ---- lane-dense padding: features -> F_PAD, nodes -> multiple of 8 ----
    h0_p = jnp.zeros((n_pad, F_PAD), jnp.float32).at[:n, :h0.shape[1]].set(h0)
    a_p = jnp.zeros((n_pad, n_pad), jnp.float32).at[:n, :n].set(a_norm)
    w_stack = jnp.zeros((num_layers, F_PAD, F_PAD), jnp.float32)
    b_stack = jnp.zeros((num_layers, 1, F_PAD), jnp.float32)
    relu_flags = []
    for li, (w, b, relu) in enumerate(layers):
        w_stack = w_stack.at[li, :w.shape[0], :w.shape[1]].set(w)
        b_stack = b_stack.at[li, :, :b.shape[1]].set(b)
        relu_flags.append(bool(relu))

    # bf16 MXU operands; bias stays f32 (f32 accumulate + f32 epilogue in-kernel).
    a_bf = a_p.astype(jnp.bfloat16)
    h0_bf = h0_p.astype(jnp.bfloat16)
    w_bf = w_stack.astype(jnp.bfloat16)

    kernel = functools.partial(_gcn_fused_kernel, relu_flags=tuple(relu_flags))

    flops = num_layers * (2 * n_pad * F_PAD * F_PAD + 2 * n_pad * n_pad * F_PAD)
    bytes_accessed = (a_bf.size * 2 + h0_bf.size * 2 + w_bf.size * 2
                      + b_stack.size * 4 + n_pad * F_PAD * 4)

    out_pad = pl.pallas_call(
        kernel,
        out_shape=jax.ShapeDtypeStruct((n_pad, F_PAD), jnp.float32),
        in_specs=[pl.BlockSpec(memory_space=pltpu.MemorySpace.VMEM)
                  for _ in range(4)],
        out_specs=pl.BlockSpec(memory_space=pltpu.MemorySpace.VMEM),
        scratch_shapes=[pltpu.VMEM((n_pad, F_PAD), jnp.float32)],
        compiler_params=pltpu.CompilerParams(
            vmem_limit_bytes=32 * 1024 * 1024),
        cost_estimate=pl.CostEstimate(flops=flops, transcendentals=0,
                                      bytes_accessed=bytes_accessed),
    )(a_bf, h0_bf, w_bf, b_stack)

    # Slice back to the un-padded logical result.
    return out_pad[:n, :f_out_last]


def gcn_reference(a_norm, dep_labels, params):
    """Pure-JAX f32 reference for correctness check."""
    h = params["embedding"][dep_labels]
    for (w, b, relu) in params["layers"]:
        h = a_norm @ (h @ w) + b
        if relu:
            h = jnp.maximum(h, 0.0)
    return h


# ------------------------------- setup ---------------------------------------
def build_params(key, num_dep_labels, dep_emb_size, dep_hidden_dim,
                 gcn_mlp_layers):
    ks = jax.random.split(key, 2 * (gcn_mlp_layers + 1) + 1)
    params = {}
    params["embedding"] = jax.random.normal(
        ks[0], (num_dep_labels, dep_emb_size), dtype=jnp.float32) * 0.1

    layers = []
    dims = ([(dep_emb_size, dep_hidden_dim, True)]
            + [(dep_hidden_dim, dep_hidden_dim, True)] * (gcn_mlp_layers - 1)
            + [(dep_hidden_dim, num_dep_labels, False)])
    for li, (f_in, f_out, relu) in enumerate(dims):
        w = jax.random.normal(ks[1 + 2 * li], (f_in, f_out),
                              dtype=jnp.float32) * (1.0 / jnp.sqrt(f_in))
        b = jax.random.normal(ks[2 + 2 * li], (1, f_out),
                              dtype=jnp.float32) * 0.01
        layers.append((w, b, relu))
    params["layers"] = layers
    return params


def build_norm_adjacency(key, n):
    """Random graph + self-loops, symmetric-normalized: D^-1/2 (A+I) D^-1/2."""
    a = (jax.random.uniform(key, (n, n)) < 0.3).astype(jnp.float32)
    a = jnp.maximum(a, a.T)                      # symmetrize
    a = a + jnp.eye(n, dtype=jnp.float32)        # self-loops (no zero in-degree)
    a = jnp.minimum(a, 1.0)
    deg = a.sum(axis=1)
    d_inv_sqrt = 1.0 / jnp.sqrt(deg)
    return a * d_inv_sqrt[:, None] * d_inv_sqrt[None, :]


if __name__ == "__main__":
    # Small, deterministic config.
    N = 16                 # number of nodes (sequence length)
    NUM_DEP_LABELS = 10    # len(config.deplabel2idx) == len(config.deplabels)
    DEP_EMB_SIZE = 32      # config.dep_emb_size
    DEP_HIDDEN_DIM = 32    # config.dep_hidden_dim
    GCN_MLP_LAYERS = 2     # config.gcn_mlp_layers

    key = jax.random.PRNGKey(0)
    k_params, k_graph, k_labels = jax.random.split(key, 3)

    params = build_params(k_params, NUM_DEP_LABELS, DEP_EMB_SIZE,
                          DEP_HIDDEN_DIM, GCN_MLP_LAYERS)
    a_norm = build_norm_adjacency(k_graph, N)
    dep_labels = jax.random.randint(k_labels, (N,), 0, NUM_DEP_LABELS,
                                    dtype=jnp.int32)

    out = gcn_forward(a_norm, dep_labels, params)
    out = jax.block_until_ready(out)

    ref = gcn_reference(a_norm, dep_labels, params)
    assert out.shape == (N, NUM_DEP_LABELS), out.shape
    # bf16 MXU inputs with f32 accumulation vs. pure-f32 reference.
    max_err = float(jnp.max(jnp.abs(out - ref)))
    assert max_err < 3e-2, f"mismatch vs reference: max abs err {max_err}"

    print("KERNEL_OK")
</pallas_src>

<mosaic_0001>
module attributes {stable_mosaic.version = 11 : i64} {
  func.func @_gcn_fused_kernel(%arg0: memref<16x16xbf16, #tpu.memory_space<vmem>>, %arg1: memref<16x128xbf16, #tpu.memory_space<vmem>>, %arg2: memref<3x128x128xbf16, #tpu.memory_space<vmem>>, %arg3: memref<3x1x128xf32, #tpu.memory_space<vmem>>, %arg4: memref<16x128xf32, #tpu.memory_space<vmem>>, %arg5: memref<16x128xf32, #tpu.memory_space<vmem>>) attributes {dimension_semantics = [], scalar_prefetch = 0 : i64, scratch_operands = 1 : i64, tpu.core_type = #tpu.core_type<tc>} {
    %c0 = arith.constant 0 : index
    %c0_0 = arith.constant 0 : index
    %0 = vector.load %arg0[%c0, %c0_0] : memref<16x16xbf16, #tpu.memory_space<vmem>>, vector<16x16xbf16>
    %c0_1 = arith.constant 0 : index
    %c0_2 = arith.constant 0 : index
    %1 = vector.load %arg1[%c0_1, %c0_2] : memref<16x128xbf16, #tpu.memory_space<vmem>>, vector<16x128xbf16>
    %c0_3 = arith.constant 0 : index
    %c0_4 = arith.constant 0 : index
    %c0_5 = arith.constant 0 : index
    %2 = vector.load %arg2[%c0_3, %c0_4, %c0_5] : memref<3x128x128xbf16, #tpu.memory_space<vmem>>, vector<1x128x128xbf16>
    %3 = vector.shape_cast %2 : vector<1x128x128xbf16> to vector<128x128xbf16>
    %cst = arith.constant dense<0.000000e+00> : vector<16x128xf32>
    %4 = tpu.matmul %1, %3, %cst {dimension_numbers = #tpu.dot_dimension_numbers<[1], [0], [0], [1], [0, 0, 1, 1], [], []>} : vector<16x128xbf16>, vector<128x128xbf16>, vector<16x128xf32> -> vector<16x128xf32>
    %5 = arith.truncf %4 : vector<16x128xf32> to vector<16x128xbf16>
    %cst_6 = arith.constant dense<0.000000e+00> : vector<16x128xf32>
    %6 = tpu.matmul %0, %5, %cst_6 {dimension_numbers = #tpu.dot_dimension_numbers<[1], [0], [0], [1], [0, 0, 1, 1], [], []>} : vector<16x16xbf16>, vector<16x128xbf16>, vector<16x128xf32> -> vector<16x128xf32>
    %c0_7 = arith.constant 0 : index
    %c0_8 = arith.constant 0 : index
    %c0_9 = arith.constant 0 : index
    %7 = vector.load %arg3[%c0_7, %c0_8, %c0_9] : memref<3x1x128xf32, #tpu.memory_space<vmem>>, vector<1x1x128xf32>
    %8 = vector.shape_cast %7 : vector<1x1x128xf32> to vector<1x128xf32>
    %9 = vector.broadcast %8 : vector<1x128xf32> to vector<16x128xf32>
    %10 = arith.addf %6, %9 : vector<16x128xf32>
    %cst_10 = arith.constant 0.000000e+00 : f32
    %11 = vector.broadcast %cst_10 : f32 to vector<16x128xf32>
    %12 = arith.maximumf %10, %11 : vector<16x128xf32>
    %c0_11 = arith.constant 0 : index
    %c0_12 = arith.constant 0 : index
    %13 = vector.load %arg5[%c0_11, %c0_12] : memref<16x128xf32, #tpu.memory_space<vmem>>, vector<16x128xf32>
    tpu.vector_store %arg5[%c0_11, %c0_12], %12 {strides = array<i32>} : memref<16x128xf32, #tpu.memory_space<vmem>>, vector<16x128xf32>,
    %c0_13 = arith.constant 0 : index
    %c0_14 = arith.constant 0 : index
    %14 = vector.load %arg5[%c0_13, %c0_14] : memref<16x128xf32, #tpu.memory_space<vmem>>, vector<16x128xf32>
    %15 = arith.truncf %14 : vector<16x128xf32> to vector<16x128xbf16>
    %c1 = arith.constant 1 : index
    %c0_15 = arith.constant 0 : index
    %c0_16 = arith.constant 0 : index
    %16 = vector.load %arg2[%c1, %c0_15, %c0_16] : memref<3x128x128xbf16, #tpu.memory_space<vmem>>, vector<1x128x128xbf16>
    %17 = vector.shape_cast %16 : vector<1x128x128xbf16> to vector<128x128xbf16>
    %cst_17 = arith.constant dense<0.000000e+00> : vector<16x128xf32>
    %18 = tpu.matmul %15, %17, %cst_17 {dimension_numbers = #tpu.dot_dimension_numbers<[1], [0], [0], [1], [0, 0, 1, 1], [], []>} : vector<16x128xbf16>, vector<128x128xbf16>, vector<16x128xf32> -> vector<16x128xf32>
    %19 = arith.truncf %18 : vector<16x128xf32> to vector<16x128xbf16>
    %cst_18 = arith.constant dense<0.000000e+00> : vector<16x128xf32>
    %20 = tpu.matmul %0, %19, %cst_18 {dimension_numbers = #tpu.dot_dimension_numbers<[1], [0], [0], [1], [0, 0, 1, 1], [], []>} : vector<16x16xbf16>, vector<16x128xbf16>, vector<16x128xf32> -> vector<16x128xf32>
    %c1_19 = arith.constant 1 : index
    %c0_20 = arith.constant 0 : index
    %c0_21 = arith.constant 0 : index
    %21 = vector.load %arg3[%c1_19, %c0_20, %c0_21] : memref<3x1x128xf32, #tpu.memory_space<vmem>>, vector<1x1x128xf32>
    %22 = vector.shape_cast %21 : vector<1x1x128xf32> to vector<1x128xf32>
    %23 = vector.broadcast %22 : vector<1x128xf32> to vector<16x128xf32>
    %24 = arith.addf %20, %23 : vector<16x128xf32>
    %cst_22 = arith.constant 0.000000e+00 : f32
    %25 = vector.broadcast %cst_22 : f32 to vector<16x128xf32>
    %26 = arith.maximumf %24, %25 : vector<16x128xf32>
    %c0_23 = arith.constant 0 : index
    %c0_24 = arith.constant 0 : index
    %27 = vector.load %arg5[%c0_23, %c0_24] : memref<16x128xf32, #tpu.memory_space<vmem>>, vector<16x128xf32>
    tpu.vector_store %arg5[%c0_23, %c0_24], %26 {strides = array<i32>} : memref<16x128xf32, #tpu.memory_space<vmem>>, vector<16x128xf32>,
    %c0_25 = arith.constant 0 : index
    %c0_26 = arith.constant 0 : index
    %28 = vector.load %arg5[%c0_25, %c0_26] : memref<16x128xf32, #tpu.memory_space<vmem>>, vector<16x128xf32>
    %29 = arith.truncf %28 : vector<16x128xf32> to vector<16x128xbf16>
    %c2 = arith.constant 2 : index
    %c0_27 = arith.constant 0 : index
    %c0_28 = arith.constant 0 : index
    %30 = vector.load %arg2[%c2, %c0_27, %c0_28] : memref<3x128x128xbf16, #tpu.memory_space<vmem>>, vector<1x128x128xbf16>
    %31 = vector.shape_cast %30 : vector<1x128x128xbf16> to vector<128x128xbf16>
    %cst_29 = arith.constant dense<0.000000e+00> : vector<16x128xf32>
    %32 = tpu.matmul %29, %31, %cst_29 {dimension_numbers = #tpu.dot_dimension_numbers<[1], [0], [0], [1], [0, 0, 1, 1], [], []>} : vector<16x128xbf16>, vector<128x128xbf16>, vector<16x128xf32> -> vector<16x128xf32>
    %33 = arith.truncf %32 : vector<16x128xf32> to vector<16x128xbf16>
    %cst_30 = arith.constant dense<0.000000e+00> : vector<16x128xf32>
    %34 = tpu.matmul %0, %33, %cst_30 {dimension_numbers = #tpu.dot_dimension_numbers<[1], [0], [0], [1], [0, 0, 1, 1], [], []>} : vector<16x16xbf16>, vector<16x128xbf16>, vector<16x128xf32> -> vector<16x128xf32>
    %c2_31 = arith.constant 2 : index
    %c0_32 = arith.constant 0 : index
    %c0_33 = arith.constant 0 : index
    %35 = vector.load %arg3[%c2_31, %c0_32, %c0_33] : memref<3x1x128xf32, #tpu.memory_space<vmem>>, vector<1x1x128xf32>
    %36 = vector.shape_cast %35 : vector<1x1x128xf32> to vector<1x128xf32>
    %37 = vector.broadcast %36 : vector<1x128xf32> to vector<16x128xf32>
    %38 = arith.addf %34, %37 : vector<16x128xf32>
    %c0_34 = arith.constant 0 : index
    %c0_35 = arith.constant 0 : index
    %39 = vector.load %arg4[%c0_34, %c0_35] : memref<16x128xf32, #tpu.memory_space<vmem>>, vector<16x128xf32>
    tpu.vector_store %arg4[%c0_34, %c0_35], %38 {strides = array<i32>} : memref<16x128xf32, #tpu.memory_space<vmem>>, vector<16x128xf32>,
    return
  }
}

</mosaic_0001>

<llo_original>
// kernel: tpu_custom_call.1
$region0: #{tpu_custom_call.1}
  #allocation0 [shape = 'u32[]', space=smem, size = 0x4, offset = 0x4, fixed_abs, tag = 'smem constant byte address 0x4 - core index']
  #allocation1 [shape = 'u32[144,128]{1,0:T(1,128)}', space=vmem, size = 0x12000, scoped, tag = 'internal scratch']
  #allocation2 [shape = 'f32[16,128]{1,0:T(8,128)}', space=vmem, size = 0x2000, scoped, tag = 'scratch operand']
  %s0 = inlined_call_operand.hbm [shape: bf16[16,16], index: 0, kind: input, shape index: {}]
  %s1 = inlined_call_operand.hbm [shape: bf16[16,128], index: 1, kind: input, shape index: {}]
  %s2 = inlined_call_operand.hbm [shape: bf16[3,128,128], index: 2, kind: input, shape index: {}]
  %s3 = inlined_call_operand.vmem [shape: f32[3,1,128], index: 3, kind: input, shape index: {}]
  %s4 = inlined_call_operand.hbm [shape: f32[16,128], index: 4, kind: output, shape index: {}]
  %s5 = sld [smem:[#allocation0]]
  $region38: #{tpu_custom_call.1} parent=0
    _
  %s7 = ssub.s32 1, %s5
  %s8 = scalar_select 0, %s7, %s5
  $region1: #{tpu_custom_call.1} parent=0
    #allocation3 [shape = 'u8[4096]{0}', space=vmem, size = 0x1000, scoped, tag = 'input window, operand 0, single buffered']
    #allocation4 [shape = 's32[1]{0}', space=sflag, size = 0x4, scoped, tag = 'scoped memory for tpu_custom_call.1']
    #allocation5 [shape = 's32[1]{0}', space=sflag, size = 0x4, scoped, tag = 'scoped memory for tpu_custom_call.1']
    #allocation6 [shape = 'u8[4096]{0}', space=vmem, size = 0x1000, scoped, tag = 'input window, operand 1, single buffered']
    #allocation7 [shape = 's32[1]{0}', space=sflag, size = 0x4, scoped, tag = 'scoped memory for tpu_custom_call.1']
    #allocation8 [shape = 'u8[98304]{0}', space=vmem, size = 0x18000, scoped, tag = 'input window, operand 2, single buffered']
    #allocation9 [shape = 'u8[8192]{0}', space=vmem, size = 0x2000, scoped, tag = 'output window, operand 0, single buffered']
    %9 = vsyncpa [#allocation4], 0
    %10 = vsyncpa [#allocation7], 0
    %11 = vsyncpa [#allocation5], 0
    // Predicated region
    $region2: #{tpu_custom_call.1} parent=1 // pred_check
      _
    $region3: #{tpu_custom_call.1} parent=1 // pred_check_branch
      %13 = sbr.rel (0) target = $region5
    $region4: #{tpu_custom_call.1} parent=1 // pred_region
      %s15 = ssub.s32 128, 128
      %16 = vsyncadd [#allocation4], %s15
      %s17 = sshll.u32 [#allocation3], 4
      %s18 = int_to_ptr.vmem [resolvable:$true] %s17
      %23 = dma.hbm_to_vmem [thread:$0]  %s0, 128, %s18, [#allocation4], 64, 64, 4
    $region5: #{tpu_custom_call.1} parent=1 // pred_fallthru
      _
    // Predicated region
    $region6: #{tpu_custom_call.1} parent=1 // pred_check
      _
    $region7: #{tpu_custom_call.1} parent=1 // pred_check_branch
      %25 = sbr.rel (0) target = $region9
    $region8: #{tpu_custom_call.1} parent=1 // pred_region
      %s27 = ssub.s32 128, 128
      %28 = vsyncadd [#allocation7], %s27
      %s29 = sshll.u32 [#allocation6], 4
      %s30 = int_to_ptr.vmem [resolvable:$true] %s29
      %35 = dma.hbm_to_vmem [thread:$0]  %s1, 128, %s30, [#allocation7], 64, 64, 4
    $region9: #{tpu_custom_call.1} parent=1 // pred_fallthru
      _
    // Predicated region
    $region10: #{tpu_custom_call.1} parent=1 // pred_check
      _
    $region11: #{tpu_custom_call.1} parent=1 // pred_check_branch
      %37 = sbr.rel (0) target = $region13
    $region12: #{tpu_custom_call.1} parent=1 // pred_region
      %s39 = ssub.s32 3072, 3072
      %40 = vsyncadd [#allocation7], %s39
      %s41 = sshll.u32 [#allocation8], 4
      %s42 = int_to_ptr.vmem [resolvable:$true] %s41
      %47 = dma.hbm_to_vmem [thread:$0]  %s2, 3072, %s42, [#allocation7], 64, 64, 4
    $region13: #{tpu_custom_call.1} parent=1 // pred_fallthru
      _
    // Predicated region
    $region14: #{tpu_custom_call.1} parent=1 // pred_check
      _
    $region15: #{tpu_custom_call.1} parent=1 // pred_check_branch
      %49 = sbr.rel (0) target = $region17
    $region16: #{tpu_custom_call.1} parent=1 // pred_region
      _
    $region17: #{tpu_custom_call.1} parent=1 // pred_fallthru
      _
    // Predicated region
    $region18: #{tpu_custom_call.1} parent=1 // pred_check
      _
    $region19: #{tpu_custom_call.1} parent=1 // pred_check_branch
      %51 = sbr.rel (0) target = $region21
    $region20: #{tpu_custom_call.1} parent=1 // pred_region
      %52 = dma.done [#allocation4], 128
    $region21: #{tpu_custom_call.1} parent=1 // pred_fallthru
      _
    // Predicated region
    $region22: #{tpu_custom_call.1} parent=1 // pred_check
      _
    $region23: #{tpu_custom_call.1} parent=1 // pred_check_branch
      %54 = sbr.rel (0) target = $region25
    $region24: #{tpu_custom_call.1} parent=1 // pred_region
      %55 = dma.done [#allocation7], 128
    $region25: #{tpu_custom_call.1} parent=1 // pred_fallthru
      _
    // Predicated region
    $region26: #{tpu_custom_call.1} parent=1 // pred_check
      _
    $region27: #{tpu_custom_call.1} parent=1 // pred_check_branch
      %57 = sbr.rel (0) target = $region29
    $region28: #{tpu_custom_call.1} parent=1 // pred_region
      %58 = dma.done [#allocation7], 3072
    $region29: #{tpu_custom_call.1} parent=1 // pred_fallthru
      _
    %v60 = vld [vmem:[#allocation3] sm:$0xf]
    %v61 = vld [vmem:[#allocation3 + $0x4] sm:$0xf]
    %v62 = vld [vmem:[#allocation6] sm:$0xf]
    %v63 = vld [vmem:[#allocation6 + $0x4] sm:$0xf]
    %v64 = vld [vmem:[#allocation8] sm:$0xf]
    %v65 = vld [vmem:[#allocation8 + $0x4] sm:$0xf]
    %v66 = vld [vmem:[#allocation8 + $0x8] sm:$0xf]
    %v67 = vld [vmem:[#allocation8 + $0xc] sm:$0xf]
    %v68 = vld [vmem:[#allocation8 + $0x10] sm:$0xf]
    %v69 = vld [vmem:[#allocation8 + $0x14] sm:$0xf]
    %v70 = vld [vmem:[#allocation8 + $0x18] sm:$0xf]
    %v71 = vld [vmem:[#allocation8 + $0x1c] sm:$0xf]
    %v72 = vld [vmem:[#allocation8 + $0x20] sm:$0xf]
    %v73 = vld [vmem:[#allocation8 + $0x24] sm:$0xf]
    %v74 = vld [vmem:[#allocation8 + $0x28] sm:$0xf]
    %v75 = vld [vmem:[#allocation8 + $0x2c] sm:$0xf]
    %v76 = vld [vmem:[#allocation8 + $0x30] sm:$0xf]
    %v77 = vld [vmem:[#allocation8 + $0x34] sm:$0xf]
    %v78 = vld [vmem:[#allocation8 + $0x38] sm:$0xf]
    %v79 = vld [vmem:[#allocation8 + $0x3c] sm:$0xf]
    %v82 = vunpack.c.l.b16 %v62
    %v83 = vunpack.c.l.b16 %v63
    %v84 = vpack.c.b16 %v83, %v82
    %v102 = vunpack.c.l.b16 %v64
    %v103 = vunpack.c.l.b16 %v65
    %v104 = vunpack.c.l.b16 %v66
    %v105 = vunpack.c.l.b16 %v67
    %v106 = vunpack.c.l.b16 %v68
    %v107 = vunpack.c.l.b16 %v69
    %v108 = vunpack.c.l.b16 %v70
    %v109 = vunpack.c.l.b16 %v71
    %v110 = vunpack.c.l.b16 %v72
    %v111 = vunpack.c.l.b16 %v73
    %v112 = vunpack.c.l.b16 %v74
    %v113 = vunpack.c.l.b16 %v75
    %v114 = vunpack.c.l.b16 %v76
    %v115 = vunpack.c.l.b16 %v77
    %v116 = vunpack.c.l.b16 %v78
    %v117 = vunpack.c.l.b16 %v79
    %v118 = vpack.c.b16 %v103, %v102
    %v119 = vpack.c.b16 %v105, %v104
    %v120 = vpack.c.b16 %v107, %v106
    %v121 = vpack.c.b16 %v109, %v108
    %v122 = vpack.c.b16 %v111, %v110
    %v123 = vpack.c.b16 %v113, %v112
    %v124 = vpack.c.b16 %v115, %v114
    %v125 = vpack.c.b16 %v117, %v116
    %134 = vmatprep.subr.bf16.mxu0 0
    %135 = vmatpush1.bf16.msra.mxu0 %v118
    %136 = vmatprep.subr.bf16.mxu0 0
    %137 = vmatpush1.bf16.msra.mxu0 %v119
    %138 = vmatprep.subr.bf16.mxu0 0
    %139 = vmatpush1.bf16.msra.mxu0 %v120
    %140 = vmatprep.subr.bf16.mxu0 0
    %141 = vmatpush1.bf16.msra.mxu0 %v121
    %142 = vmatprep.subr.bf16.mxu0 0
    %143 = vmatpush1.bf16.msra.mxu0 %v122
    %144 = vmatprep.subr.bf16.mxu0 0
    %145 = vmatpush1.bf16.msra.mxu0 %v123
    %146 = vmatprep.subr.bf16.mxu0 0
    %147 = vmatpush1.bf16.msra.mxu0 %v124
    %148 = vmatprep.subr.bf16.mxu0 0
    %149 = vmatpush1.bf16.msra.mxu0 %v125
    %150 = vmatprep.subr.bf16.mxu0 0
    %151 = vmatpush1.bf16.msra.mxu0 0
    %152 = vmatprep.subr.bf16.mxu0 0
    %153 = vmatpush1.bf16.msra.mxu0 0
    %154 = vmatprep.subr.bf16.mxu0 0
    %155 = vmatpush1.bf16.msra.mxu0 0
    %156 = vmatprep.subr.bf16.mxu0 0
    %157 = vmatpush1.bf16.msra.mxu0 0
    %158 = vmatprep.subr.bf16.mxu0 0
    %159 = vmatpush1.bf16.msra.mxu0 0
    %160 = vmatprep.subr.bf16.mxu0 0
    %161 = vmatpush1.bf16.msra.mxu0 0
    %162 = vmatprep.subr.bf16.mxu0 0
    %163 = vmatpush1.bf16.msra.mxu0 0
    %164 = vmatprep.subr.bf16.mxu0 0
    %165 = vmatpush1.bf16.msra.mxu0 0
    %166 = vmatprep.mubr.bf16.mxu0 0
    %167 = vmatmul.mubr.bf16.gmra.mrb[0].mxu0 %v84
    %v168 = vpop.f32.mrb[0].mxu0
    %v169 = vadd.f32 0.0, %v168
    %v170 = vpop.f32.mrb[0].mxu0
    %v171 = vpop.f32.mrb[0].mxu0
    %v172 = vadd.f32 0.0, %v171
    %v173 = vpop.f32.mrb[0].mxu0
    %174 = vdwg.mxu0
    %v175 = vpack.c.bf16 %v172, %v169
    %v176 = vld [vmem:[%s3] sm:$0x1]
    %v178 = vlaneseq
    %v179 = vshrl.u32 %v178, 7
    %v180 = vsub.s32 0, %v179
    %v181 = vrot.slane %v176, %v180
    %v185 = vunpack.c.l.b16 %v60
    %v186 = vunpack.c.l.b16 %v61
    %v187 = vpack.c.b16 %v186, %v185
    %vm188 = vcmask 130048
    %v190 = vsel %vm188, %v187, 0
    %192 = vmatprep.subr.bf16.mxu0 0
    %193 = vmatpush1.bf16.msra.mxu0 %v175
    %194 = vmatprep.subr.bf16.mxu0 0
    %195 = vmatpush1.bf16.msra.mxu0 0
    %196 = vmatprep.subr.bf16.mxu0 0
    %197 = vmatpush1.bf16.msra.mxu0 0
    %198 = vmatprep.subr.bf16.mxu0 0
    %199 = vmatpush1.bf16.msra.mxu0 0
    %200 = vmatprep.subr.bf16.mxu0 0
    %201 = vmatpush1.bf16.msra.mxu0 0
    %202 = vmatprep.subr.bf16.mxu0 0
    %203 = vmatpush1.bf16.msra.mxu0 0
    %204 = vmatprep.subr.bf16.mxu0 0
    %205 = vmatpush1.bf16.msra.mxu0 0
    %206 = vmatprep.subr.bf16.mxu0 0
    %207 = vmatpush1.bf16.msra.mxu0 0
    %208 = vmatprep.subr.bf16.mxu0 0
    %209 = vmatpush1.bf16.msra.mxu0 0
    %210 = vmatprep.subr.bf16.mxu0 0
    %211 = vmatpush1.bf16.msra.mxu0 0
    %212 = vmatprep.subr.bf16.mxu0 0
    %213 = vmatpush1.bf16.msra.mxu0 0
    %214 = vmatprep.subr.bf16.mxu0 0
    %215 = vmatpush1.bf16.msra.mxu0 0
    %216 = vmatprep.subr.bf16.mxu0 0
    %217 = vmatpush1.bf16.msra.mxu0 0
    %218 = vmatprep.subr.bf16.mxu0 0
    %219 = vmatpush1.bf16.msra.mxu0 0
    %220 = vmatprep.subr.bf16.mxu0 0
    %221 = vmatpush1.bf16.msra.mxu0 0
    %222 = vmatprep.subr.bf16.mxu0 0
    %223 = vmatpush1.bf16.msra.mxu0 0
    %224 = vmatprep.mubr.bf16.mxu0 0
    %225 = vmatmul.mubr.bf16.gmra.mrb[0].mxu0 %v190
    %v226 = vpop.f32.mrb[0].mxu0
    %v227 = vadd.f32 %v181, %v226
    %v228 = vpop.f32.mrb[0].mxu0
    %v229 = vpop.f32.mrb[0].mxu0
    %v230 = vadd.f32 %v181, %v229
    %v231 = vpop.f32.mrb[0].mxu0
    %232 = vdwg.mxu0
    %v233 = vmax.f32 %v227, 0.0
    %v234 = vmax.f32 %v230, 0.0
    %235 = vst [vmem:[#allocation2] sm:$0xff] %v233
    %236 = vst [vmem:[#allocation2 + $0x8] sm:$0xff] %v234
    %v237 = vld [vmem:[#allocation2] sm:$0xff]
    %v238 = vld [vmem:[#allocation2 + $0x8] sm:$0xff]
    %v239 = vpack.c.bf16 %v238, %v237
    %s240 = scalar_lea.vmem [#allocation8], 64
    %v241 = vld [vmem:[%s240] sm:$0xf]
    %v242 = vld [vmem:[%s240 + $0x4] sm:$0xf]
    %v243 = vld [vmem:[%s240 + $0x8] sm:$0xf]
    %v244 = vld [vmem:[%s240 + $0xc] sm:$0xf]
    %v245 = vld [vmem:[%s240 + $0x10] sm:$0xf]
    %v246 = vld [vmem:[%s240 + $0x14] sm:$0xf]
    %v247 = vld [vmem:[%s240 + $0x18] sm:$0xf]
    %v248 = vld [vmem:[%s240 + $0x1c] sm:$0xf]
    %v249 = vld [vmem:[%s240 + $0x20] sm:$0xf]
    %v250 = vld [vmem:[%s240 + $0x24] sm:$0xf]
    %v251 = vld [vmem:[%s240 + $0x28] sm:$0xf]
    %v252 = vld [vmem:[%s240 + $0x2c] sm:$0xf]
    %v253 = vld [vmem:[%s240 + $0x30] sm:$0xf]
    %v254 = vld [vmem:[%s240 + $0x34] sm:$0xf]
    %v255 = vld [vmem:[%s240 + $0x38] sm:$0xf]
    %v256 = vld [vmem:[%s240 + $0x3c] sm:$0xf]
    %v273 = vunpack.c.l.b16 %v241
    %v274 = vunpack.c.l.b16 %v242
    %v275 = vunpack.c.l.b16 %v243
    %v276 = vunpack.c.l.b16 %v244
    %v277 = vunpack.c.l.b16 %v245
    %v278 = vunpack.c.l.b16 %v246
    %v279 = vunpack.c.l.b16 %v247
    %v280 = vunpack.c.l.b16 %v248
    %v281 = vunpack.c.l.b16 %v249
    %v282 = vunpack.c.l.b16 %v250
    %v283 = vunpack.c.l.b16 %v251
    %v284 = vunpack.c.l.b16 %v252
    %v285 = vunpack.c.l.b16 %v253
    %v286 = vunpack.c.l.b16 %v254
    %v287 = vunpack.c.l.b16 %v255
    %v288 = vunpack.c.l.b16 %v256
    %v289 = vpack.c.b16 %v274, %v273
    %v290 = vpack.c.b16 %v276, %v275
    %v291 = vpack.c.b16 %v278, %v277
    %v292 = vpack.c.b16 %v280, %v279
    %v293 = vpack.c.b16 %v282, %v281
    %v294 = vpack.c.b16 %v284, %v283
    %v295 = vpack.c.b16 %v286, %v285
    %v296 = vpack.c.b16 %v288, %v287
    %305 = vmatprep.subr.bf16.mxu0 0
    %306 = vmatpush1.bf16.msra.mxu0 %v289
    %307 = vmatprep.subr.bf16.mxu0 0
    %308 = vmatpush1.bf16.msra.mxu0 %v290
    %309 = vmatprep.subr.bf16.mxu0 0
    %310 = vmatpush1.bf16.msra.mxu0 %v291
    %311 = vmatprep.subr.bf16.mxu0 0
    %312 = vmatpush1.bf16.msra.mxu0 %v292
    %313 = vmatprep.subr.bf16.mxu0 0
    %314 = vmatpush1.bf16.msra.mxu0 %v293
    %315 = vmatprep.subr.bf16.mxu0 0
    %316 = vmatpush1.bf16.msra.mxu0 %v294
    %317 = vmatprep.subr.bf16.mxu0 0
    %318 = vmatpush1.bf16.msra.mxu0 %v295
    %319 = vmatprep.subr.bf16.mxu0 0
    %320 = vmatpush1.bf16.msra.mxu0 %v296
    %321 = vmatprep.subr.bf16.mxu0 0
    %322 = vmatpush1.bf16.msra.mxu0 0
    %323 = vmatprep.subr.bf16.mxu0 0
    %324 = vmatpush1.bf16.msra.mxu0 0
    %325 = vmatprep.subr.bf16.mxu0 0
    %326 = vmatpush1.bf16.msra.mxu0 0
    %327 = vmatprep.subr.bf16.mxu0 0
    %328 = vmatpush1.bf16.msra.mxu0 0
    %329 = vmatprep.subr.bf16.mxu0 0
    %330 = vmatpush1.bf16.msra.mxu0 0
    %331 = vmatprep.subr.bf16.mxu0 0
    %332 = vmatpush1.bf16.msra.mxu0 0
    %333 = vmatprep.subr.bf16.mxu0 0
    %334 = vmatpush1.bf16.msra.mxu0 0
    %335 = vmatprep.subr.bf16.mxu0 0
    %336 = vmatpush1.bf16.msra.mxu0 0
    %337 = vmatprep.mubr.bf16.mxu0 0
    %338 = vmatmul.mubr.bf16.gmra.mrb[0].mxu0 %v239
    %v339 = vpop.f32.mrb[0].mxu0
    %v340 = vadd.f32 0.0, %v339
    %v341 = vpop.f32.mrb[0].mxu0
    %v342 = vpop.f32.mrb[0].mxu0
    %v343 = vadd.f32 0.0, %v342
    %v344 = vpop.f32.mrb[0].mxu0
    %345 = vdwg.mxu0
    %v346 = vpack.c.bf16 %v343, %v340
    %s347 = scalar_lea.vmem %s3, 1
    %v348 = vld [vmem:[%s347] sm:$0x1]
    %v350 = vlaneseq
    %v351 = vshrl.u32 %v350, 7
    %v352 = vsub.s32 0, %v351
    %v353 = vrot.slane %v348, %v352
    %355 = vmatprep.subr.bf16.mxu0 0
    %356 = vmatpush1.bf16.msra.mxu0 %v346
    %357 = vmatprep.subr.bf16.mxu0 0
    %358 = vmatpush1.bf16.msra.mxu0 0
    %359 = vmatprep.subr.bf16.mxu0 0
    %360 = vmatpush1.bf16.msra.mxu0 0
    %361 = vmatprep.subr.bf16.mxu0 0
    %362 = vmatpush1.bf16.msra.mxu0 0
    %363 = vmatprep.subr.bf16.mxu0 0
    %364 = vmatpush1.bf16.msra.mxu0 0
    %365 = vmatprep.subr.bf16.mxu0 0
    %366 = vmatpush1.bf16.msra.mxu0 0
    %367 = vmatprep.subr.bf16.mxu0 0
    %368 = vmatpush1.bf16.msra.mxu0 0
    %369 = vmatprep.subr.bf16.mxu0 0
    %370 = vmatpush1.bf16.msra.mxu0 0
    %371 = vmatprep.subr.bf16.mxu0 0
    %372 = vmatpush1.bf16.msra.mxu0 0
    %373 = vmatprep.subr.bf16.mxu0 0
    %374 = vmatpush1.bf16.msra.mxu0 0
    %375 = vmatprep.subr.bf16.mxu0 0
    %376 = vmatpush1.bf16.msra.mxu0 0
    %377 = vmatprep.subr.bf16.mxu0 0
    %378 = vmatpush1.bf16.msra.mxu0 0
    %379 = vmatprep.subr.bf16.mxu0 0
    %380 = vmatpush1.bf16.msra.mxu0 0
    %381 = vmatprep.subr.bf16.mxu0 0
    %382 = vmatpush1.bf16.msra.mxu0 0
    %383 = vmatprep.subr.bf16.mxu0 0
    %384 = vmatpush1.bf16.msra.mxu0 0
    %385 = vmatprep.subr.bf16.mxu0 0
    %386 = vmatpush1.bf16.msra.mxu0 0
    %387 = vmatprep.mubr.bf16.mxu0 0
    %388 = vmatmul.mubr.bf16.gmra.mrb[0].mxu0 %v190
    %v389 = vpop.f32.mrb[0].mxu0
    %v390 = vadd.f32 %v353, %v389
    %v391 = vpop.f32.mrb[0].mxu0
    %v392 = vpop.f32.mrb[0].mxu0
    %v393 = vadd.f32 %v353, %v392
    %v394 = vpop.f32.mrb[0].mxu0
    %395 = vdwg.mxu0
    %v396 = vmax.f32 %v390, 0.0
    %v397 = vmax.f32 %v393, 0.0
    %398 = vst [vmem:[#allocation2] sm:$0xff] %v396
    %399 = vst [vmem:[#allocation2 + $0x8] sm:$0xff] %v397
    %v400 = vld [vmem:[#allocation2] sm:$0xff]
    %v401 = vld [vmem:[#allocation2 + $0x8] sm:$0xff]
    %v402 = vpack.c.bf16 %v401, %v400
    %s403 = scalar_lea.vmem [#allocation8], 128
    %v404 = vld [vmem:[%s403] sm:$0xf]
    %v405 = vld [vmem:[%s403 + $0x4] sm:$0xf]
    %v406 = vld [vmem:[%s403 + $0x8] sm:$0xf]
    %v407 = vld [vmem:[%s403 + $0xc] sm:$0xf]
    %v408 = vld [vmem:[%s403 + $0x10] sm:$0xf]
    %v409 = vld [vmem:[%s403 + $0x14] sm:$0xf]
    %v410 = vld [vmem:[%s403 + $0x18] sm:$0xf]
    %v411 = vld [vmem:[%s403 + $0x1c] sm:$0xf]
    %v412 = vld [vmem:[%s403 + $0x20] sm:$0xf]
    %v413 = vld [vmem:[%s403 + $0x24] sm:$0xf]
    %v414 = vld [vmem:[%s403 + $0x28] sm:$0xf]
    %v415 = vld [vmem:[%s403 + $0x2c] sm:$0xf]
    %v416 = vld [vmem:[%s403 + $0x30] sm:$0xf]
    %v417 = vld [vmem:[%s403 + $0x34] sm:$0xf]
    %v418 = vld [vmem:[%s403 + $0x38] sm:$0xf]
    %v419 = vld [vmem:[%s403 + $0x3c] sm:$0xf]
    %v436 = vunpack.c.l.b16 %v404
    %v437 = vunpack.c.l.b16 %v405
    %v438 = vunpack.c.l.b16 %v406
    %v439 = vunpack.c.l.b16 %v407
    %v440 = vunpack.c.l.b16 %v408
    %v441 = vunpack.c.l.b16 %v409
    %v442 = vunpack.c.l.b16 %v410
    %v443 = vunpack.c.l.b16 %v411
    %v444 = vunpack.c.l.b16 %v412
    %v445 = vunpack.c.l.b16 %v413
    %v446 = vunpack.c.l.b16 %v414
    %v447 = vunpack.c.l.b16 %v415
    %v448 = vunpack.c.l.b16 %v416
    %v449 = vunpack.c.l.b16 %v417
    %v450 = vunpack.c.l.b16 %v418
    %v451 = vunpack.c.l.b16 %v419
    %v452 = vpack.c.b16 %v437, %v436
    %v453 = vpack.c.b16 %v439, %v438
    %v454 = vpack.c.b16 %v441, %v440
    %v455 = vpack.c.b16 %v443, %v442
    %v456 = vpack.c.b16 %v445, %v444
    %v457 = vpack.c.b16 %v447, %v446
    %v458 = vpack.c.b16 %v449, %v448
    %v459 = vpack.c.b16 %v451, %v450
    %468 = vmatprep.subr.bf16.mxu0 0
    %469 = vmatpush1.bf16.msra.mxu0 %v452
    %470 = vmatprep.subr.bf16.mxu0 0
    %471 = vmatpush1.bf16.msra.mxu0 %v453
    %472 = vmatprep.subr.bf16.mxu0 0
    %473 = vmatpush1.bf16.msra.mxu0 %v454
    %474 = vmatprep.subr.bf16.mxu0 0
    %475 = vmatpush1.bf16.msra.mxu0 %v455
    %476 = vmatprep.subr.bf16.mxu0 0
    %477 = vmatpush1.bf16.msra.mxu0 %v456
    %478 = vmatprep.subr.bf16.mxu0 0
    %479 = vmatpush1.bf16.msra.mxu0 %v457
    %480 = vmatprep.subr.bf16.mxu0 0
    %481 = vmatpush1.bf16.msra.mxu0 %v458
    %482 = vmatprep.subr.bf16.mxu0 0
    %483 = vmatpush1.bf16.msra.mxu0 %v459
    %484 = vmatprep.subr.bf16.mxu0 0
    %485 = vmatpush1.bf16.msra.mxu0 0
    %486 = vmatprep.subr.bf16.mxu0 0
    %487 = vmatpush1.bf16.msra.mxu0 0
    %488 = vmatprep.subr.bf16.mxu0 0
    %489 = vmatpush1.bf16.msra.mxu0 0
    %490 = vmatprep.subr.bf16.mxu0 0
    %491 = vmatpush1.bf16.msra.mxu0 0
    %492 = vmatprep.subr.bf16.mxu0 0
    %493 = vmatpush1.bf16.msra.mxu0 0
    %494 = vmatprep.subr.bf16.mxu0 0
    %495 = vmatpush1.bf16.msra.mxu0 0
    %496 = vmatprep.subr.bf16.mxu0 0
    %497 = vmatpush1.bf16.msra.mxu0 0
    %498 = vmatprep.subr.bf16.mxu0 0
    %499 = vmatpush1.bf16.msra.mxu0 0
    %500 = vmatprep.mubr.bf16.mxu0 0
    %501 = vmatmul.mubr.bf16.gmra.mrb[0].mxu0 %v402
    %v502 = vpop.f32.mrb[0].mxu0
    %v503 = vadd.f32 0.0, %v502
    %v504 = vpop.f32.mrb[0].mxu0
    %v505 = vpop.f32.mrb[0].mxu0
    %v506 = vadd.f32 0.0, %v505
    %v507 = vpop.f32.mrb[0].mxu0
    %508 = vdwg.mxu0
    %v509 = vpack.c.bf16 %v506, %v503
    %s510 = scalar_lea.vmem %s3, 2
    %v511 = vld [vmem:[%s510] sm:$0x1]
    %v513 = vlaneseq
    %v514 = vshrl.u32 %v513, 7
    %v515 = vsub.s32 0, %v514
    %v516 = vrot.slane %v511, %v515
    %518 = vmatprep.subr.bf16.mxu0 0
    %519 = vmatpush1.bf16.msra.mxu0 %v509
    %520 = vmatprep.subr.bf16.mxu0 0
    %521 = vmatpush1.bf16.msra.mxu0 0
    %522 = vmatprep.subr.bf16.mxu0 0
    %523 = vmatpush1.bf16.msra.mxu0 0
    %524 = vmatprep.subr.bf16.mxu0 0
    %525 = vmatpush1.bf16.msra.mxu0 0
    %526 = vmatprep.subr.bf16.mxu0 0
    %527 = vmatpush1.bf16.msra.mxu0 0
    %528 = vmatprep.subr.bf16.mxu0 0
    %529 = vmatpush1.bf16.msra.mxu0 0
    %530 = vmatprep.subr.bf16.mxu0 0
    %531 = vmatpush1.bf16.msra.mxu0 0
    %532 = vmatprep.subr.bf16.mxu0 0
    %533 = vmatpush1.bf16.msra.mxu0 0
    %534 = vmatprep.subr.bf16.mxu0 0
    %535 = vmatpush1.bf16.msra.mxu0 0
    %536 = vmatprep.subr.bf16.mxu0 0
    %537 = vmatpush1.bf16.msra.mxu0 0
    %538 = vmatprep.subr.bf16.mxu0 0
    %539 = vmatpush1.bf16.msra.mxu0 0
    %540 = vmatprep.subr.bf16.mxu0 0
    %541 = vmatpush1.bf16.msra.mxu0 0
    %542 = vmatprep.subr.bf16.mxu0 0
    %543 = vmatpush1.bf16.msra.mxu0 0
    %544 = vmatprep.subr.bf16.mxu0 0
    %545 = vmatpush1.bf16.msra.mxu0 0
    %546 = vmatprep.subr.bf16.mxu0 0
    %547 = vmatpush1.bf16.msra.mxu0 0
    %548 = vmatprep.subr.bf16.mxu0 0
    %549 = vmatpush1.bf16.msra.mxu0 0
    %550 = vmatprep.mubr.bf16.mxu0 0
    %551 = vmatmul.mubr.bf16.gmra.mrb[0].mxu0 %v190
    %v552 = vpop.f32.mrb[0].mxu0
    %v553 = vadd.f32 %v516, %v552
    %v554 = vpop.f32.mrb[0].mxu0
    %v555 = vpop.f32.mrb[0].mxu0
    %v556 = vadd.f32 %v516, %v555
    %v557 = vpop.f32.mrb[0].mxu0
    %558 = vdwg.mxu0
    %559 = vst [vmem:[#allocation9] sm:$0xff] %v553
    %560 = vst [vmem:[#allocation9 + $0x8] sm:$0xff] %v556
    // Predicated region
    $region30: #{tpu_custom_call.1} parent=1 // pred_check
      _
    $region31: #{tpu_custom_call.1} parent=1 // pred_check_branch
      %562 = sbr.rel (0) target = $region33
    $region32: #{tpu_custom_call.1} parent=1 // pred_region
      %s564 = ssub.s32 256, 256
      %565 = vsyncadd [#allocation5], %s564
      %s566 = sshll.u32 [#allocation9], 4
      %s567 = int_to_ptr.vmem [resolvable:$true] %s566
      %572 = dma.vmem_to_hbm [thread:$0]  %s567, 256, %s4, [#allocation5], 128, 128, 8
    $region33: #{tpu_custom_call.1} parent=1 // pred_fallthru
      _
    // Predicated region
    $region34: #{tpu_custom_call.1} parent=1 // pred_check
      _
    $region35: #{tpu_custom_call.1} parent=1 // pred_check_branch
      %574 = sbr.rel (0) target = $region37
    $region36: #{tpu_custom_call.1} parent=1 // pred_region
      %575 = dma.done [#allocation5], 256
    $region37: #{tpu_custom_call.1} parent=1 // pred_fallthru
      _
    %576 = vsyncpa [#allocation4], 1
    %577 = vsyncpa [#allocation7], 1
    %578 = vsyncpa [#allocation5], 1

</llo_original>
